<compile_context>
chip_gen: v7x
topology: tpu7x:2x2x1
jax: 0.10.0
libtpu: 0.0.40
codegen_flags: <defaults>
</compile_context>

<pallas_src>
import functools

import numpy as np
import jax
import jax.numpy as jnp
from jax.experimental import pallas as pl
from jax.experimental.pallas import tpu as pltpu


_PI32 = np.float32(np.pi)
# mysinc(0) quirk: torch replaces x==0 with 1.0 *before* sin(pi*x)/(pi*x), so the value
# at a zero-offset tap is sin(pi)/pi evaluated in float32 (~ -2.8e-8), not 1.0.
_SINC0_QUIRK = float(np.float32(np.sin(_PI32)) / _PI32)


def _cdiv(a, b):
    return -(-a // b)


def kaiser_window(M: int, beta: float = 12.0) -> np.ndarray:
    """torch.signal.windows.kaiser(M, beta=12.0, sym=True) equivalent."""
    if M == 1:
        return np.ones((1,), np.float32)
    constant = 2.0 * beta / (M - 1)
    k = -beta + np.arange(M, dtype=np.float64) * constant
    k = np.minimum(k, beta)
    w = np.i0(np.sqrt(np.maximum(beta * beta - k * k, 0.0))) / np.i0(beta)
    return w.astype(np.float32)


def _frac_delay_kernel(delay_ref, ws_ref, wq_ref, out_ref, *, lenfilter, fs, pack):
    # delay_ref: (TB, pack)   f32  one delay (ms) per packed sub-row
    # ws_ref   : (1, WIDTH)   f32  -(-1)^n * kaiser(L) per sub-row (0 on pad lanes)
    # wq_ref   : (1, WIDTH)   f32  sinc0-quirk * kaiser(L)         (0 on pad lanes)
    # out_ref  : (TB, WIDTH)  f32  `pack` sub-rows of L taps, side by side on lanes
    tb, width = out_ref.shape
    pi = jnp.float32(np.pi)
    inv_pi = jnp.float32(1.0 / np.pi)
    c = jnp.float32((lenfilter - 1) / 2)
    half = jnp.float32(0.5)

    # Tap position n - (L-1)/2 along the lane axis (single-vreg iota work, no extra inputs).
    lane = jax.lax.broadcasted_iota(jnp.int32, (1, width), 1)
    n_i = lane
    for p in range(1, _cdiv(width, lenfilter)):
        n_i = jnp.where(lane >= p * lenfilter, lane - p * lenfilter, n_i)
    nc = n_i.astype(jnp.float32) - c

    # Per-delay quantities, vectorized over the whole (tb, pack) block (one EUP sin pass):
    #   sin(pi*(n - c - tau)) = -(-1)^(n+k) * sin(pi*r),
    #   k = round(c + tau),  r = tau - (k - c)   (r == -x bit-exact at the tap n == k)
    dl = delay_ref[...]                                   # (tb, pack)
    tau = dl * jnp.float32(0.001) * jnp.float32(fs)       # same op order as torch
    k = jnp.floor(c + tau + half)
    r = tau - (k - c)
    sinr = jnp.sin(pi * r)
    kh = k * half
    sgn_k = jnp.float32(1.0) - jnp.float32(4.0) * (kh - jnp.floor(kh))   # (-1)^k
    num = sgn_k * sinr * inv_pi                           # sin(pi*x)/pi == sign_n * num

    # Broadcast per-segment columns across the lane axis (pack-1 chained selects).
    tau_b = tau[:, 0:1]
    num_b = num[:, 0:1]
    for p in range(1, pack):
        m = lane >= p * lenfilter
        tau_b = jnp.where(m, tau[:, p:p + 1], tau_b)
        num_b = jnp.where(m, num[:, p:p + 1], num_b)

    x = nc - tau_b                                        # identical rounding to reference
    # h = sinc(x) * kaiser : the (-1)^n sign and 1/pi are folded into ws_ref / num.
    # x==0 quirk is applied AFTER the window multiply (wq_ref keeps its unsigned value).
    # NOTE: the unselected branch is 0/0=NaN at x==0; select does not propagate it.
    h = jnp.where(x == jnp.float32(0.0), wq_ref[...], num_b * ws_ref[...] / x)

    # Per-sub-row normalization h / sum(h) (lane reductions ride the XLU slot).
    if pack == 1:
        inv = pl.reciprocal(jnp.sum(h, axis=-1, keepdims=True))
        out_ref[...] = h * inv
    else:
        s_full = jnp.sum(h, axis=-1, keepdims=True)
        sums, acc = [], None
        for p in range(pack - 1):                         # last segment sum by subtraction
            m = lane < (p + 1) * lenfilter
            if p > 0:
                m = m & (lane >= p * lenfilter)
            sp = jnp.sum(jnp.where(m, h, jnp.float32(0.0)), axis=-1, keepdims=True)
            sums.append(sp)
            acc = sp if acc is None else acc + sp
        sums.append(s_full - acc)
        inv_b = pl.reciprocal(sums[0])
        for p in range(1, pack):
            inv_b = jnp.where(lane >= p * lenfilter, pl.reciprocal(sums[p]), inv_b)
        out_ref[...] = h * inv_b


def fractional_delay_taps(delay, lenfilter: int = 64, fs: int = 44100):
    """JAX/Pallas equivalent of FractionalDelayFiltering(delay, Fs).forward(x) -> taps."""
    delay = jnp.atleast_1d(jnp.asarray(delay, dtype=jnp.float32)).reshape(-1)
    B = int(delay.shape[0])

    # Lane-dense packing: `pack` batch rows share one 128-lane output row.
    if lenfilter <= 128 and 128 % lenfilter == 0:
        pack = 128 // lenfilter
        width = 128
    else:
        pack = 1
        width = _cdiv(lenfilter, 128) * 128               # pad lanes carry window == 0

    rows = _cdiv(B, pack)                                 # packed output rows needed
    target_tb = 512                                       # fat tiles ~85% of HBM roofline
    if rows < 2 * target_tb:
        nblocks = 1                                       # no forced split for small work
        tb = max(8, _cdiv(rows, 8) * 8)
    else:
        nblocks = _cdiv(rows, target_tb)
        if nblocks % 2:
            nblocks += 1                                  # even count shards v7x's 2 TCs
        tb = max(8, _cdiv(_cdiv(rows, nblocks), 8) * 8)
    rows_p = nblocks * tb

    dpad = jnp.zeros((rows_p * pack,), jnp.float32).at[:B].set(delay)
    delay_packed = dpad.reshape(rows_p, pack)

    w = kaiser_window(lenfilter)
    n = np.arange(lenfilter)
    sign_n = np.where(n % 2 == 0, np.float32(-1.0), np.float32(1.0))     # -(-1)^n
    ws_np = np.zeros((1, width), np.float32)
    wq_np = np.zeros((1, width), np.float32)
    for p in range(pack):
        sl = slice(p * lenfilter, (p + 1) * lenfilter)
        ws_np[0, sl] = sign_n * w                         # sign folded into the window
        wq_np[0, sl] = np.float32(_SINC0_QUIRK) * w       # quirk applied post-window
    ws = jnp.asarray(ws_np)
    wq = jnp.asarray(wq_np)

    kernel = functools.partial(_frac_delay_kernel, lenfilter=lenfilter, fs=fs, pack=pack)

    out = pl.pallas_call(
        kernel,
        grid=(nblocks,),
        out_shape=jax.ShapeDtypeStruct((rows_p, width), jnp.float32),
        in_specs=[
            pl.BlockSpec((tb, pack), lambda i: (i, 0)),
            pl.BlockSpec((1, width), lambda i: (0, 0)),
            pl.BlockSpec((1, width), lambda i: (0, 0)),
        ],
        out_specs=pl.BlockSpec((tb, width), lambda i: (i, 0)),
        compiler_params=pltpu.CompilerParams(dimension_semantics=("parallel",)),
    )(delay_packed, ws, wq)

    if pack > 1:
        taps = out.reshape(rows_p * pack, lenfilter)      # free row-major reshape
    else:
        taps = out[:, :lenfilter]
    return taps[:B]


def _reference(delay, lenfilter=64, fs=44100):
    """Pure-JAX reference mirroring the PyTorch loop (for verification)."""
    delay = jnp.atleast_1d(jnp.asarray(delay, dtype=jnp.float32)).reshape(-1)
    n = jnp.arange(lenfilter, dtype=jnp.float32)
    wind = jnp.asarray(kaiser_window(lenfilter))
    tau = delay[:, None] * 0.001 * fs
    x = n[None, :] - (lenfilter - 1) / 2 - tau
    x = jnp.where(x == 0.0, jnp.float32(1.0), x)
    h = jnp.sin(jnp.float32(np.pi) * x) / (jnp.float32(np.pi) * x)
    h = h * wind[None, :]
    return h / jnp.sum(h, axis=-1, keepdims=True)


if __name__ == "__main__":
    key = jax.random.PRNGKey(0)
    B, LENFILTER, FS = 8, 64, 44100
    # delays in ms, small enough that the sinc peak stays inside the filter
    delay_ms = jax.random.uniform(key, (B,), jnp.float32, minval=0.0, maxval=0.5)

    taps = fractional_delay_taps(delay_ms, lenfilter=LENFILTER, fs=FS)
    taps = jax.block_until_ready(taps)

    ref = _reference(delay_ms, lenfilter=LENFILTER, fs=FS)
    assert taps.shape == (B, LENFILTER)
    assert taps.dtype == jnp.float32
    np.testing.assert_allclose(np.asarray(taps), np.asarray(ref), rtol=1e-5, atol=2e-6)

    print("KERNEL_OK")
</pallas_src>

<mosaic_0001>
module attributes {stable_mosaic.version = 11 : i64} {
  func.func @_frac_delay_kernel(%arg0: i32, %arg1: memref<8x2xf32, #tpu.memory_space<vmem>>, %arg2: memref<1x128xf32, #tpu.memory_space<vmem>>, %arg3: memref<1x128xf32, #tpu.memory_space<vmem>>, %arg4: memref<8x128xf32, #tpu.memory_space<vmem>>) attributes {dimension_semantics = [#tpu.dimension_semantics<parallel>], iteration_bounds = array<i64: 1>, scalar_prefetch = 0 : i64, scratch_operands = 0 : i64, tpu.core_type = #tpu.core_type<tc>, window_params = [{transform_indices = @transform_0, window_bounds = array<i64: 8, 2>}, {pipeline_mode = #tpu.pipeline_mode<synchronous>, transform_indices = @transform_1, window_bounds = array<i64: 1, 128>}, {pipeline_mode = #tpu.pipeline_mode<synchronous>, transform_indices = @transform_2, window_bounds = array<i64: 1, 128>}, {transform_indices = @transform_3, window_bounds = array<i64: 8, 128>}]} {
    %0 = tpu.iota {dimensions = array<i32: 1>} : vector<1x128xi32>
    %c64_i32 = arith.constant 64 : i32
    %1 = vector.broadcast %c64_i32 : i32 to vector<1x128xi32>
    %2 = arith.cmpi sge, %0, %1 : vector<1x128xi32>
    %c64_i32_0 = arith.constant 64 : i32
    %3 = vector.broadcast %c64_i32_0 : i32 to vector<1x128xi32>
    %4 = arith.subi %0, %3 : vector<1x128xi32>
    %5 = arith.select %2, %4, %0 : vector<1x128xi1>, vector<1x128xi32>
    %6 = arith.sitofp %5 : vector<1x128xi32> to vector<1x128xf32>
    %cst = arith.constant 3.150000e+01 : f32
    %7 = vector.broadcast %cst : f32 to vector<1x128xf32>
    %8 = arith.subf %6, %7 : vector<1x128xf32>
    %c0 = arith.constant 0 : index
    %c0_1 = arith.constant 0 : index
    %9 = vector.load %arg1[%c0, %c0_1] : memref<8x2xf32, #tpu.memory_space<vmem>>, vector<8x2xf32>
    %cst_2 = arith.constant 1.000000e-03 : f32
    %10 = vector.broadcast %cst_2 : f32 to vector<8x2xf32>
    %11 = arith.mulf %9, %10 : vector<8x2xf32>
    %cst_3 = arith.constant 4.410000e+04 : f32
    %12 = vector.broadcast %cst_3 : f32 to vector<8x2xf32>
    %13 = arith.mulf %11, %12 : vector<8x2xf32>
    %cst_4 = arith.constant 3.150000e+01 : f32
    %14 = vector.broadcast %cst_4 : f32 to vector<8x2xf32>
    %15 = arith.addf %14, %13 : vector<8x2xf32>
    %cst_5 = arith.constant 5.000000e-01 : f32
    %16 = vector.broadcast %cst_5 : f32 to vector<8x2xf32>
    %17 = arith.addf %15, %16 : vector<8x2xf32>
    %18 = math.floor %17 : vector<8x2xf32>
    %cst_6 = arith.constant 3.150000e+01 : f32
    %19 = vector.broadcast %cst_6 : f32 to vector<8x2xf32>
    %20 = arith.subf %18, %19 : vector<8x2xf32>
    %21 = arith.subf %13, %20 : vector<8x2xf32>
    %cst_7 = arith.constant 3.14159274 : f32
    %22 = vector.broadcast %cst_7 : f32 to vector<8x2xf32>
    %23 = arith.mulf %22, %21 : vector<8x2xf32>
    %24 = math.sin %23 : vector<8x2xf32>
    %cst_8 = arith.constant 5.000000e-01 : f32
    %25 = vector.broadcast %cst_8 : f32 to vector<8x2xf32>
    %26 = arith.mulf %18, %25 : vector<8x2xf32>
    %27 = math.floor %26 : vector<8x2xf32>
    %28 = arith.subf %26, %27 : vector<8x2xf32>
    %cst_9 = arith.constant 4.000000e+00 : f32
    %29 = vector.broadcast %cst_9 : f32 to vector<8x2xf32>
    %30 = arith.mulf %29, %28 : vector<8x2xf32>
    %cst_10 = arith.constant 1.000000e+00 : f32
    %31 = vector.broadcast %cst_10 : f32 to vector<8x2xf32>
    %32 = arith.subf %31, %30 : vector<8x2xf32>
    %33 = arith.mulf %32, %24 : vector<8x2xf32>
    %cst_11 = arith.constant 0.318309873 : f32
    %34 = vector.broadcast %cst_11 : f32 to vector<8x2xf32>
    %35 = arith.mulf %33, %34 : vector<8x2xf32>
    %36 = vector.extract_strided_slice %13 {offsets = [0, 0], sizes = [8, 1], strides = [1, 1]} : vector<8x2xf32> to vector<8x1xf32>
    %37 = vector.extract_strided_slice %35 {offsets = [0, 0], sizes = [8, 1], strides = [1, 1]} : vector<8x2xf32> to vector<8x1xf32>
    %c64_i32_12 = arith.constant 64 : i32
    %38 = vector.broadcast %c64_i32_12 : i32 to vector<1x128xi32>
    %39 = arith.cmpi sge, %0, %38 : vector<1x128xi32>
    %40 = vector.extract_strided_slice %13 {offsets = [0, 1], sizes = [8, 1], strides = [1, 1]} : vector<8x2xf32> to vector<8x1xf32>
    %41 = vector.shape_cast %39 : vector<1x128xi1> to vector<1x128xi1>
    %42 = vector.broadcast %41 : vector<1x128xi1> to vector<8x128xi1>
    %43 = vector.shape_cast %40 : vector<8x1xf32> to vector<8x1xf32>
    %44 = vector.broadcast %43 : vector<8x1xf32> to vector<8x128xf32>
    %45 = vector.shape_cast %36 : vector<8x1xf32> to vector<8x1xf32>
    %46 = vector.broadcast %45 : vector<8x1xf32> to vector<8x128xf32>
    %47 = arith.select %42, %44, %46 : vector<8x128xi1>, vector<8x128xf32>
    %48 = vector.extract_strided_slice %35 {offsets = [0, 1], sizes = [8, 1], strides = [1, 1]} : vector<8x2xf32> to vector<8x1xf32>
    %49 = vector.shape_cast %39 : vector<1x128xi1> to vector<1x128xi1>
    %50 = vector.broadcast %49 : vector<1x128xi1> to vector<8x128xi1>
    %51 = vector.shape_cast %48 : vector<8x1xf32> to vector<8x1xf32>
    %52 = vector.broadcast %51 : vector<8x1xf32> to vector<8x128xf32>
    %53 = vector.shape_cast %37 : vector<8x1xf32> to vector<8x1xf32>
    %54 = vector.broadcast %53 : vector<8x1xf32> to vector<8x128xf32>
    %55 = arith.select %50, %52, %54 : vector<8x128xi1>, vector<8x128xf32>
    %56 = vector.broadcast %8 : vector<1x128xf32> to vector<8x128xf32>
    %57 = arith.subf %56, %47 : vector<8x128xf32>
    %cst_13 = arith.constant 0.000000e+00 : f32
    %58 = vector.broadcast %cst_13 : f32 to vector<8x128xf32>
    %59 = arith.cmpf oeq, %57, %58 : vector<8x128xf32>
    %c0_14 = arith.constant 0 : index
    %c0_15 = arith.constant 0 : index
    %60 = vector.load %arg3[%c0_14, %c0_15] : memref<1x128xf32, #tpu.memory_space<vmem>>, vector<1x128xf32>
    %c0_16 = arith.constant 0 : index
    %c0_17 = arith.constant 0 : index
    %61 = vector.load %arg2[%c0_16, %c0_17] : memref<1x128xf32, #tpu.memory_space<vmem>>, vector<1x128xf32>
    %62 = vector.broadcast %61 : vector<1x128xf32> to vector<8x128xf32>
    %63 = arith.mulf %55, %62 : vector<8x128xf32>
    %64 = arith.divf %63, %57 : vector<8x128xf32>
    %65 = vector.shape_cast %60 : vector<1x128xf32> to vector<1x128xf32>
    %66 = vector.broadcast %65 : vector<1x128xf32> to vector<8x128xf32>
    %67 = arith.select %59, %66, %64 : vector<8x128xi1>, vector<8x128xf32>
    %cst_18 = arith.constant dense<0.000000e+00> : vector<8xf32>
    %68 = vector.multi_reduction <add>, %67, %cst_18 [1] : vector<8x128xf32> to vector<8xf32>
    %69 = vector.shape_cast %68 : vector<8xf32> to vector<8x1xf32>
    %c64_i32_19 = arith.constant 64 : i32
    %70 = vector.broadcast %c64_i32_19 : i32 to vector<1x128xi32>
    %71 = arith.cmpi slt, %0, %70 : vector<1x128xi32>
    %cst_20 = arith.constant 0.000000e+00 : f32
    %72 = vector.shape_cast %71 : vector<1x128xi1> to vector<1x128xi1>
    %73 = vector.broadcast %72 : vector<1x128xi1> to vector<8x128xi1>
    %74 = vector.broadcast %cst_20 : f32 to vector<8x128xf32>
    %75 = arith.select %73, %67, %74 : vector<8x128xi1>, vector<8x128xf32>
    %cst_21 = arith.constant dense<0.000000e+00> : vector<8xf32>
    %76 = vector.multi_reduction <add>, %75, %cst_21 [1] : vector<8x128xf32> to vector<8xf32>
    %77 = vector.shape_cast %76 : vector<8xf32> to vector<8x1xf32>
    %78 = arith.subf %69, %77 : vector<8x1xf32>
    %79 = tpu.reciprocal %77 : vector<8x1xf32> -> vector<8x1xf32>
    %c64_i32_22 = arith.constant 64 : i32
    %80 = vector.broadcast %c64_i32_22 : i32 to vector<1x128xi32>
    %81 = arith.cmpi sge, %0, %80 : vector<1x128xi32>
    %82 = tpu.reciprocal %78 : vector<8x1xf32> -> vector<8x1xf32>
    %83 = vector.shape_cast %81 : vector<1x128xi1> to vector<1x128xi1>
    %84 = vector.broadcast %83 : vector<1x128xi1> to vector<8x128xi1>
    %85 = vector.shape_cast %82 : vector<8x1xf32> to vector<8x1xf32>
    %86 = vector.broadcast %85 : vector<8x1xf32> to vector<8x128xf32>
    %87 = vector.shape_cast %79 : vector<8x1xf32> to vector<8x1xf32>
    %88 = vector.broadcast %87 : vector<8x1xf32> to vector<8x128xf32>
    %89 = arith.select %84, %86, %88 : vector<8x128xi1>, vector<8x128xf32>
    %90 = arith.mulf %67, %89 : vector<8x128xf32>
    %c0_23 = arith.constant 0 : index
    %c0_24 = arith.constant 0 : index
    %91 = vector.load %arg4[%c0_23, %c0_24] : memref<8x128xf32, #tpu.memory_space<vmem>>, vector<8x128xf32>
    tpu.vector_store %arg4[%c0_23, %c0_24], %90 {strides = array<i32>} : memref<8x128xf32, #tpu.memory_space<vmem>>, vector<8x128xf32>,
    return
  }
  func.func @transform_0(%arg0: i32) -> (i32, i32) {
    %c0_i32 = arith.constant 0 : i32
    %c0_i32_0 = arith.constant 0 : i32
    return %arg0, %c0_i32 : i32, i32
  }
  func.func @transform_1(%arg0: i32) -> (i32, i32) {
    %c0_i32 = arith.constant 0 : i32
    %c0_i32_0 = arith.constant 0 : i32
    %c0_i32_1 = arith.constant 0 : i32
    return %c0_i32, %c0_i32_0 : i32, i32
  }
  func.func @transform_2(%arg0: i32) -> (i32, i32) {
    %c0_i32 = arith.constant 0 : i32
    %c0_i32_0 = arith.constant 0 : i32
    %c0_i32_1 = arith.constant 0 : i32
    return %c0_i32, %c0_i32_0 : i32, i32
  }
  func.func @transform_3(%arg0: i32) -> (i32, i32) {
    %c0_i32 = arith.constant 0 : i32
    %c0_i32_0 = arith.constant 0 : i32
    return %arg0, %c0_i32 : i32, i32
  }
}

</mosaic_0001>

<llo_original>
// kernel: tpu_custom_call.1
$region0: #{tpu_custom_call.1}
  #allocation0 [shape = 'u32[]', space=smem, size = 0x4, offset = 0x4, fixed_abs, tag = 'smem constant byte address 0x4 - core index']
  #allocation1 [shape = 'u32[144,128]{1,0:T(1,128)}', space=vmem, size = 0x12000, scoped, tag = 'internal scratch']
  %s0 = inlined_call_operand.vmem [shape: f32[8,2], index: 0, kind: input, shape index: {}]
  %s1 = inlined_call_operand.vmem [shape: f32[1,128], index: 1, kind: input, shape index: {}]
  %s2 = inlined_call_operand.vmem [shape: f32[1,128], index: 2, kind: input, shape index: {}]
  %s3 = inlined_call_operand.hbm [shape: f32[8,128], index: 3, kind: output, shape index: {}]
  %s4 = sld [smem:[#allocation0]]
  $region22: #{tpu_custom_call.1} parent=0
    _
  %s6 = ssub.s32 1, %s4
  %s7 = scalar_select 0, %s6, %s4
  $region1: #{tpu_custom_call.1} parent=0
    #allocation2 [shape = 'u8[4096]{0}', space=vmem, size = 0x1000, scoped, tag = 'output window, operand 0, single buffered']
    #allocation3 [shape = 's32[1]{0}', space=sflag, size = 0x4, scoped, tag = 'scoped memory for tpu_custom_call.1']
    %8 = vsyncpa [#allocation3], 0
    // Predicated region
    $region2: #{tpu_custom_call.1} parent=1 // pred_check
      _
    $region3: #{tpu_custom_call.1} parent=1 // pred_check_branch
      %10 = sbr.rel (0) target = $region5
    $region4: #{tpu_custom_call.1} parent=1 // pred_region
      _
    $region5: #{tpu_custom_call.1} parent=1 // pred_fallthru
      _
    // Predicated region
    $region6: #{tpu_custom_call.1} parent=1 // pred_check
      _
    $region7: #{tpu_custom_call.1} parent=1 // pred_check_branch
      %12 = sbr.rel (0) target = $region9
    $region8: #{tpu_custom_call.1} parent=1 // pred_region
      _
    $region9: #{tpu_custom_call.1} parent=1 // pred_fallthru
      _
    // Predicated region
    $region10: #{tpu_custom_call.1} parent=1 // pred_check
      _
    $region11: #{tpu_custom_call.1} parent=1 // pred_check_branch
      %14 = sbr.rel (0) target = $region13
    $region12: #{tpu_custom_call.1} parent=1 // pred_region
      _
    $region13: #{tpu_custom_call.1} parent=1 // pred_fallthru
      _
    %v15 = vlaneseq
    %v16 = vand.u32 %v15, 127
    %vm17 = vcmp.ge.s32.totalorder %v16, 64
    %v18 = vsub.s32 %v16, 64
    %v19 = vsel %vm17, %v18, %v16
    %v20 = vcvt.s32.f32 %v19
    %v21 = vsub.f32 %v20, 31.5
    %v22 = vld [vmem:[%s0] sm:$0xff]
    %v23 = vmul.f32 %v22, 0.001
    %v24 = vmul.f32 %v23, 44100.0
    %v25 = vadd.f32 %v24, 31.5
    %v26 = vadd.f32 %v25, 0.5
    %v27 = vfloor.f32 %v26
    %v28 = vsub.f32 %v27, 31.5
    %v29 = vsub.f32 %v24, %v28
    %v30 = vmul.f32 %v29, 3.1415927
    %v31 = vand.u32 2147483647, %v30
    %vm32 = vcmp.le.f32.partialorder %v31, 0.7853982
    %vm33 = vcmp.lt.s32.totalorder %v30, 0
    %v34 = vand.u32 %v30, 2139095040
    %v35 = vshrl.u32 %v34, 23
    %v36 = vsub.s32 %v35, 127
    %v37 = vand.u32 2147483647, %v30
    %v38 = vand.u32 %v37, 8388607
    %v39 = vor.u32 %v38, 8388608
    %v40 = vsub.s32 0, %v39
    %v41 = vadd.s32 %v36, 1
    %vm42 = vcmp.gt.s32.totalorder %v41, 0
    %v43 = vsel %vm42, %v41, 0
    %v44 = vshrl.u32 %v43, 5
    %v45 = vand.u32 %v43, 31
    %v46 = vsub.s32 32, %v45
    %v47 = vshrl.u32 683565275, %v46
    %v48 = vshll.u32 683565275, %v45
    %v49 = vshrl.u32 2475754826, %v46
    %v50 = vor.u32 %v48, %v49
    %v51 = vshll.u32 2475754826, %v45
    %v52 = vshrl.u32 2131351028, %v46
    %v53 = vor.u32 %v51, %v52
    %v54 = vshll.u32 2131351028, %v45
    %v55 = vshrl.u32 2102212464, %v46
    %v56 = vor.u32 %v54, %v55
    %v57 = vshll.u32 2102212464, %v45
    %v58 = vshrl.u32 920167782, %v46
    %v59 = vor.u32 %v57, %v58
    %v60 = vshll.u32 920167782, %v45
    %v61 = vshrl.u32 1326507024, %v46
    %v62 = vor.u32 %v60, %v61
    %vm63 = vcmp.lt.s32.totalorder %v44, 1
    %vm64 = vcmp.lt.s32.totalorder %v44, 2
    %vm65 = vcmp.lt.s32.totalorder %v44, 3
    %vm66 = vcmp.lt.s32.totalorder %v44, 4
    %v67 = vsel %vm63, %v47, %v50
    %v68 = vsel %vm66, %v56, 2102212464
    %v69 = vsel %vm65, %v53, %v68
    %v70 = vsel %vm64, %v67, %v69
    %v71 = vsel %vm63, %v50, %v53
    %v72 = vsel %vm66, %v59, 920167782
    %v73 = vsel %vm65, %v56, %v72
    %v74 = vsel %vm64, %v71, %v73
    %v75 = vsel %vm63, %v53, %v56
    %v76 = vsel %vm66, %v62, 1326507024
    %v77 = vsel %vm65, %v59, %v76
    %v78 = vsel %vm64, %v75, %v77
    %v79 = vshll.u32 %v39, 8
    %v80 = vmul.u32.u64.compose %v79, %v78
    %v81 = vextract.low.u32 %v80
    %v82 = vextract.high.u32 %v80
    %v83 = vmul.u32.u64.compose %v79, %v74
    %v84 = vextract.low.u32 %v83
    %v85 = vextract.high.u32 %v83
    %v86 = vmul.u32 %v79, %v70
    %v87 = vadd.s32 %v82, %v84
    %vm88 = vc.u32 %v82, %v84
    %v89 = vadd.s32 %v85, 1
    %v90 = vsel %vm88, %v89, %v85
    %v91 = vadd.s32 %v86, %v90
    %v92 = vadd.s32 %v91, 536870912
    %v93 = vshrl.u32 %v92, 30
    %v94 = vshll.u32 %v93, 30
    %v95 = vsub.s32 %v91, %v94
    %vm96 = vcmp.lt.s32.totalorder %v95, 0
    %v97 = vsub.s32 0, %v95
    %v98 = vsel %vm96, %v97, %v95
    %v99 = vclz %v98
    %v100 = vsub.s32 %v99, 2
    %vm101 = vcmp.gt.s32.totalorder 0, %v100
    %v102 = vsel %vm101, 0, %v100
    %v103 = vsub.s32 32, %v102
    %v104 = vshll.u32 %v95, %v102
    %v105 = vshrl.u32 %v87, %v103
    %v106 = vor.u32 %v104, %v105
    %v107 = vsub.s32 4294967266, %v102
    %v108 = vadd.s32 %v107, 127
    %v109 = vshll.u32 %v108, 23
    %v110 = vor.u32 4788187, %v109
    %v111 = vand.u32 2147483647, %v110
    %v113 = vcvt.s32.f32 %v106
    %v114 = vmul.f32 %v113, %v111
    %v115 = vxor.u32 %v114, 2147483648
    %v116 = vsel %vm33, %v115, %v114
    %v117 = vsub.s32 4, %v93
    %v118 = vsel %vm33, %v117, %v93
    %v119 = vsel %vm32, %v30, %v116
    %v120 = vsel %vm32, 0, %v118
    %v121 = vcosq.f32.pop %v119
    %v122 = vsinq.f32.pop %v119
    %vm123 = vweird.f32 %v30
    %v124 = vadd.s32 %v120, 3
    %v125 = vand.u32 %v124, 3
    %vm126 = vcmp.lt.s32.totalorder %v125, 2
    %vm127 = vcmp.eq.s32.totalorder %v125, 0
    %v128 = vxor.u32 %v122, 2147483648
    %v129 = vsel %vm127, %v121, %v128
    %vm130 = vcmp.eq.s32.totalorder %v125, 2
    %v131 = vxor.u32 %v121, 2147483648
    %v132 = vsel %vm130, %v131, %v122
    %v133 = vsel %vm126, %v129, %v132
    %v134 = vsel %vm123, nan, %v133
    %v135 = vmul.f32 %v27, 0.5
    %v136 = vfloor.f32 %v135
    %v137 = vsub.f32 %v135, %v136
    %v138 = vmul.f32 %v137, 4.0
    %v139 = vsub.f32 1.0, %v138
    %v140 = vmul.f32 %v139, %v134
    %v141 = vmul.f32 %v140, 0.31830987
    %v142 = vsel %vm17, 1, 0
    %vm143 = vcmp.eq.s32.totalorder %v142, 1
    %145 = vset.pattern.permute.xlu0 1
    %146 = vperm.xlu0 %145, %v24
    %v147 = vpop.permute.xlu0 %146
    %149 = vset.pattern.permute.xlu0 0
    %150 = vperm.xlu0 %149, %v24
    %v151 = vpop.permute.xlu0 %150
    %v153 = vsel %vm143, %v147, %v151
    %155 = vset.pattern.permute.xlu0 1
    %156 = vperm.xlu0 %155, %v141
    %v157 = vpop.permute.xlu0 %156
    %159 = vset.pattern.permute.xlu0 0
    %160 = vperm.xlu0 %159, %v141
    %v161 = vpop.permute.xlu0 %160
    %v163 = vsel %vm143, %v157, %v161
    %v164 = vsub.f32 %v21, %v153
    %vm165 = vcmp.eq.f32.partialorder %v164, 0.0
    %v166 = vld [vmem:[%s2] sm:$0x1]
    %v167 = vld [vmem:[%s1] sm:$0x1]
    %v169 = vlaneseq
    %v170 = vshrl.u32 %v169, 7
    %v171 = vsub.s32 0, %v170
    %v172 = vrot.slane %v167, %v171
    %v174 = vmul.f32 %v163, %v172
    %v175 = vrcp.pop %v164
    %v176 = vmul.f32 %v174, %v175
    %v178 = vlaneseq
    %v179 = vshrl.u32 %v178, 7
    %v180 = vsub.s32 0, %v179
    %v181 = vrot.slane %v166, %v180
    %v183 = vsel %vm165, %v181, %v176
    %184 = vadd.xlane.f32.xlu0 %v183
    %v185 = vpop.xlane.xlu0 %184
    %vm186 = vcmp.lt.s32.totalorder %v16, 64
    %v187 = vsel %vm186, 1, 0
    %vm188 = vcmp.eq.s32.totalorder %v187, 1
    %v189 = vsel %vm188, %v183, 0.0
    %190 = vadd.xlane.f32.xlu0 %v189
    %v191 = vpop.xlane.xlu0 %190
    %v192 = vsub.f32 %v185, %v191
    %v193 = vrcp.pop %v191
    %v194 = vrcp.pop %v192
    %v195 = vsel %vm143, %v194, %v193
    %v196 = vmul.f32 %v183, %v195
    %197 = vst [vmem:[#allocation2] sm:$0xff] %v196
    // Predicated region
    $region14: #{tpu_custom_call.1} parent=1 // pred_check
      _
    $region15: #{tpu_custom_call.1} parent=1 // pred_check_branch
      %199 = sbr.rel (0) target = $region17
    $region16: #{tpu_custom_call.1} parent=1 // pred_region
      %s201 = ssub.s32 128, 128
      %202 = vsyncadd [#allocation3], %s201
      %s204 = sshll.u32 [#allocation2], 4
      %s205 = int_to_ptr.vmem [resolvable:$true] %s204
      %207 = dma.vmem_to_hbm [thread:$0]  %s205, 128, %s3, [#allocation3]
    $region17: #{tpu_custom_call.1} parent=1 // pred_fallthru
      _
    // Predicated region
    $region18: #{tpu_custom_call.1} parent=1 // pred_check
      _
    $region19: #{tpu_custom_call.1} parent=1 // pred_check_branch
      %209 = sbr.rel (0) target = $region21
    $region20: #{tpu_custom_call.1} parent=1 // pred_region
      %210 = dma.done [#allocation3], 128
    $region21: #{tpu_custom_call.1} parent=1 // pred_fallthru
      _
    %211 = vsyncpa [#allocation3], 1

</llo_original>
